<compile_context>
chip_gen: v7x
topology: tpu7x:2x2x1
jax: 0.10.0
libtpu: 0.0.40
codegen_flags: <defaults>
</compile_context>

<pallas_src>
import functools

import jax
import jax.numpy as jnp
from jax.experimental import pallas as pl
from jax.experimental.pallas import tpu as pltpu


def _round_up(x: int, m: int) -> int:
    return ((x + m - 1) // m) * m


def _proj_kernel(x_ref, w_ref, b_ref, o_ref):
    # x_ref: (TILE_N, K)  w_ref: (K, TILE_E)  b_ref: (1, TILE_E)  o_ref: (TILE_N, TILE_E)
    x = x_ref[...].astype(jnp.float32)
    w = w_ref[...].astype(jnp.float32)
    b = b_ref[...].astype(jnp.float32)
    k_dim = x_ref.shape[-1]

    if k_dim <= 16:
        # Tiny contraction dim (K=4): unrolled VPU broadcast-FMAs; a 256-deep MXU
        # pass would waste >97% of the contraction.  This work hides under the
        # dominant output-store DMA on v5e/v6e.
        # TODO(synk): on v7x (3.2 TB/s HBM) A/B this against the jnp.dot branch;
        # the VALU slot may become co-critical with the store there.
        acc = x[:, 0:1] * w[0:1, :]
        for k in range(1, k_dim):
            acc = acc + x[:, k : k + 1] * w[k : k + 1, :]
    else:
        acc = jnp.dot(x, w, preferred_element_type=jnp.float32)

    o_ref[...] = (acc + b).astype(o_ref.dtype)


@functools.partial(jax.jit, static_argnames=("tile_n",))
def time_series_projector(x, weight, bias, *, tile_n: int = 2048):
    """Equivalent of TimeSeriesProjector.forward (y = x @ weight.T + bias).

    x:      (..., input_dim)
    weight: (embedding_dim, input_dim)   -- PyTorch nn.Linear layout
    bias:   (embedding_dim,)
    returns (..., embedding_dim)
    """
    in_dim = x.shape[-1]
    emb_dim = weight.shape[0]
    lead_shape = x.shape[:-1]
    out_dtype = x.dtype

    x2d = x.reshape(-1, in_dim)  # (N, K)
    n = x2d.shape[0]

    if n == 0:  # zero-length grid guard
        return jnp.zeros((*lead_shape, emb_dim), dtype=out_dtype)

    # Row tile: multiple of 8, no larger than the sublane-rounded row count.
    tile_n = min(tile_n, _round_up(n, 8))
    n_tiles = pl.cdiv(n, tile_n)

    # Split E into two lane-dense blocks when there are only a few row tiles so
    # both v7x TensorCores get work; keep E whole otherwise to minimize per-step
    # overhead (no effect on 1-TC v5e/v6e either way).
    if emb_dim % 256 == 0 and n_tiles < 4:
        tile_e = emb_dim // 2
    else:
        tile_e = emb_dim
    e_tiles = emb_dim // tile_e

    # Keep parameters in native (f32) precision; VMEM-resident and tiny.
    w_t = weight.T                   # (K, E)
    b2d = bias.reshape(1, emb_dim)   # (1, E)

    grid = (n_tiles, e_tiles)

    # Per-step VMEM (double-buffered blocks) + headroom; cap below v7x's 64 MiB
    # physical VMEM, and raise past v5e's 16 MiB scoped default.
    per_step = 2 * (
        tile_n * max(in_dim, 128) * x2d.dtype.itemsize          # x block (lane-padded)
        + tile_n * tile_e * jnp.dtype(out_dtype).itemsize        # output block
        + _round_up(in_dim, 8) * tile_e * w_t.dtype.itemsize     # weight block
        + 8 * tile_e * b2d.dtype.itemsize                        # bias block
    )
    vmem_limit = int(min(max(per_step + (8 << 20), 32 << 20), 56 << 20))

    bytes_accessed = (
        n * in_dim * x2d.dtype.itemsize
        + in_dim * emb_dim * w_t.dtype.itemsize
        + emb_dim * b2d.dtype.itemsize
        + n * emb_dim * jnp.dtype(out_dtype).itemsize
    )

    out = pl.pallas_call(
        _proj_kernel,
        out_shape=jax.ShapeDtypeStruct((n, emb_dim), out_dtype),
        grid=grid,
        in_specs=[
            pl.BlockSpec((tile_n, in_dim), lambda i, j: (i, 0)),   # x rows (revisited over j)
            pl.BlockSpec((in_dim, tile_e), lambda i, j: (0, j)),   # weight slab (resident per j)
            pl.BlockSpec((1, tile_e), lambda i, j: (0, j)),        # bias slab
        ],
        out_specs=pl.BlockSpec((tile_n, tile_e), lambda i, j: (i, j)),
        compiler_params=pltpu.CompilerParams(
            dimension_semantics=("parallel", "parallel"),
            vmem_limit_bytes=vmem_limit,
        ),
        cost_estimate=pl.CostEstimate(
            flops=2 * n * in_dim * emb_dim,
            transcendentals=0,
            bytes_accessed=bytes_accessed,
        ),
    )(x2d, w_t, b2d)

    # TODO(synk): optional bf16 output (halves the dominant store traffic) if the
    # downstream consumer tolerates it; kept f32 to match the PyTorch reference.
    return out.reshape(*lead_shape, emb_dim)


if __name__ == "__main__":
    input_dim = 4
    embedding_dim = 768
    batch, seq = 2, 8

    key = jax.random.PRNGKey(0)
    kx, kw, kb = jax.random.split(key, 3)

    # Deterministic parameter init (PyTorch-Linear-style uniform bound 1/sqrt(in)).
    bound = 1.0 / (input_dim ** 0.5)
    weight = jax.random.uniform(
        kw, (embedding_dim, input_dim), jnp.float32, -bound, bound
    )
    bias = jax.random.uniform(kb, (embedding_dim,), jnp.float32, -bound, bound)

    # Example time-series input: (batch, seq, input_dim), feature-last.
    x = jax.random.normal(kx, (batch, seq, input_dim), jnp.float32)

    y = time_series_projector(x, weight, bias)
    y = jax.block_until_ready(y)

    # Correctness check against a plain-JAX reference of the PyTorch forward.
    y_ref = x @ weight.T + bias
    assert y.shape == (batch, seq, embedding_dim)
    assert jnp.allclose(y, y_ref, atol=1e-5, rtol=1e-5)

    print("KERNEL_OK")
</pallas_src>

<mosaic_0001>
module attributes {stable_mosaic.version = 11 : i64} {
  func.func @_proj_kernel(%arg0: i32, %arg1: i32, %arg2: memref<16x4xf32, #tpu.memory_space<vmem>>, %arg3: memref<4x384xf32, #tpu.memory_space<vmem>>, %arg4: memref<1x384xf32, #tpu.memory_space<vmem>>, %arg5: memref<16x384xf32, #tpu.memory_space<vmem>>) attributes {dimension_semantics = [#tpu.dimension_semantics<parallel>, #tpu.dimension_semantics<parallel>], iteration_bounds = array<i64: 1, 2>, scalar_prefetch = 0 : i64, scratch_operands = 0 : i64, tpu.core_type = #tpu.core_type<tc>, window_params = [{transform_indices = @transform_0, window_bounds = array<i64: 16, 4>}, {transform_indices = @transform_1, window_bounds = array<i64: 4, 384>}, {transform_indices = @transform_2, window_bounds = array<i64: 1, 384>}, {transform_indices = @transform_3, window_bounds = array<i64: 16, 384>}]} {
    %c0 = arith.constant 0 : index
    %c0_0 = arith.constant 0 : index
    %0 = vector.load %arg2[%c0, %c0_0] : memref<16x4xf32, #tpu.memory_space<vmem>>, vector<16x4xf32>
    %c0_1 = arith.constant 0 : index
    %c0_2 = arith.constant 0 : index
    %1 = vector.load %arg3[%c0_1, %c0_2] : memref<4x384xf32, #tpu.memory_space<vmem>>, vector<4x384xf32>
    %c0_3 = arith.constant 0 : index
    %c0_4 = arith.constant 0 : index
    %2 = vector.load %arg4[%c0_3, %c0_4] : memref<1x384xf32, #tpu.memory_space<vmem>>, vector<1x384xf32>
    %3 = vector.extract_strided_slice %0 {offsets = [0, 0], sizes = [16, 1], strides = [1, 1]} : vector<16x4xf32> to vector<16x1xf32>
    %4 = vector.extract_strided_slice %1 {offsets = [0, 0], sizes = [1, 384], strides = [1, 1]} : vector<4x384xf32> to vector<1x384xf32>
    %5 = vector.broadcast %3 : vector<16x1xf32> to vector<16x384xf32>
    %6 = vector.broadcast %4 : vector<1x384xf32> to vector<16x384xf32>
    %7 = arith.mulf %5, %6 : vector<16x384xf32>
    %8 = vector.extract_strided_slice %0 {offsets = [0, 1], sizes = [16, 1], strides = [1, 1]} : vector<16x4xf32> to vector<16x1xf32>
    %9 = vector.extract_strided_slice %1 {offsets = [1, 0], sizes = [1, 384], strides = [1, 1]} : vector<4x384xf32> to vector<1x384xf32>
    %10 = vector.broadcast %8 : vector<16x1xf32> to vector<16x384xf32>
    %11 = vector.broadcast %9 : vector<1x384xf32> to vector<16x384xf32>
    %12 = arith.mulf %10, %11 : vector<16x384xf32>
    %13 = arith.addf %7, %12 : vector<16x384xf32>
    %14 = vector.extract_strided_slice %0 {offsets = [0, 2], sizes = [16, 1], strides = [1, 1]} : vector<16x4xf32> to vector<16x1xf32>
    %15 = vector.extract_strided_slice %1 {offsets = [2, 0], sizes = [1, 384], strides = [1, 1]} : vector<4x384xf32> to vector<1x384xf32>
    %16 = vector.broadcast %14 : vector<16x1xf32> to vector<16x384xf32>
    %17 = vector.broadcast %15 : vector<1x384xf32> to vector<16x384xf32>
    %18 = arith.mulf %16, %17 : vector<16x384xf32>
    %19 = arith.addf %13, %18 : vector<16x384xf32>
    %20 = vector.extract_strided_slice %0 {offsets = [0, 3], sizes = [16, 1], strides = [1, 1]} : vector<16x4xf32> to vector<16x1xf32>
    %21 = vector.extract_strided_slice %1 {offsets = [3, 0], sizes = [1, 384], strides = [1, 1]} : vector<4x384xf32> to vector<1x384xf32>
    %22 = vector.broadcast %20 : vector<16x1xf32> to vector<16x384xf32>
    %23 = vector.broadcast %21 : vector<1x384xf32> to vector<16x384xf32>
    %24 = arith.mulf %22, %23 : vector<16x384xf32>
    %25 = arith.addf %19, %24 : vector<16x384xf32>
    %26 = vector.broadcast %2 : vector<1x384xf32> to vector<16x384xf32>
    %27 = arith.addf %25, %26 : vector<16x384xf32>
    %c0_5 = arith.constant 0 : index
    %c0_6 = arith.constant 0 : index
    %28 = vector.load %arg5[%c0_5, %c0_6] : memref<16x384xf32, #tpu.memory_space<vmem>>, vector<16x384xf32>
    tpu.vector_store %arg5[%c0_5, %c0_6], %27 {strides = array<i32>} : memref<16x384xf32, #tpu.memory_space<vmem>>, vector<16x384xf32>,
    return
  }
  func.func @transform_0(%arg0: i32, %arg1: i32) -> (i32, i32) {
    %c0_i32 = arith.constant 0 : i32
    %c0_i32_0 = arith.constant 0 : i32
    return %arg0, %c0_i32 : i32, i32
  }
  func.func @transform_1(%arg0: i32, %arg1: i32) -> (i32, i32) {
    %c0_i32 = arith.constant 0 : i32
    %c0_i32_0 = arith.constant 0 : i32
    return %c0_i32, %arg1 : i32, i32
  }
  func.func @transform_2(%arg0: i32, %arg1: i32) -> (i32, i32) {
    %c0_i32 = arith.constant 0 : i32
    %c0_i32_0 = arith.constant 0 : i32
    return %c0_i32, %arg1 : i32, i32
  }
  func.func @transform_3(%arg0: i32, %arg1: i32) -> (i32, i32) {
    %c0_i32 = arith.constant 0 : i32
    return %arg0, %arg1 : i32, i32
  }
}

</mosaic_0001>

<llo_original>
// kernel: time_series_projector.1
$region0: #{time_series_projector.1}
  #allocation0 [shape = 'u32[]', space=smem, size = 0x4, offset = 0x4, fixed_abs, tag = 'smem constant byte address 0x4 - core index']
  #allocation1 [shape = 'u32[144,128]{1,0:T(1,128)}', space=vmem, size = 0x12000, scoped, tag = 'internal scratch']
  %s0 = inlined_call_operand.vmem [shape: f32[16,4], index: 0, kind: input, shape index: {}]
  %s1 = inlined_call_operand.vmem [shape: f32[4,768], index: 1, kind: input, shape index: {}]
  %s2 = inlined_call_operand.vmem [shape: f32[1,768], index: 2, kind: input, shape index: {}]
  %s3 = inlined_call_operand.hbm [shape: f32[16,768], index: 3, kind: output, shape index: {}]
  %s4 = sld [smem:[#allocation0]]
  $region45: #{time_series_projector.1} parent=0
    _
  %s6 = ssub.s32 1, %s4
  %s7 = scalar_select 0, %s6, %s4
  $region1: #{time_series_projector.1} parent=0
    #allocation2 [shape = 'u8[49152]{0}', space=vmem, size = 0xc000, scoped, tag = 'output window, operand 0']
    #allocation3 [shape = 's32[2]{0}', space=sflag, size = 0x8, scoped, tag = 'scoped memory for time_series_projector.1']
    %8 = vsyncpa [#allocation3], 0
    %s9 = scalar_lea.sflag [#allocation3], 1
    %10 = vsyncpa %s9, 0
    loop: start=0, step=1, limit=4
    $region2: #{time_series_projector.1} parent=1 // loop_pre_header
      _
    $region3: #{time_series_projector.1} parent=1 // loop_header
      %s12 = sphi 0, %s16
      %p13 = scmp.ge.s32.totalorder %s12, 4
      %s19 = sphi 0, %s31
      %s20 = sphi 0, %s27
      %s21 = sphi 0, %s19
      %s22 = sphi 0, %s20
      %s23 = sphi 0, %s21
      %s24 = sphi 0, %s22
      %s34 = sphi 0, %s36
      %s37 = sphi 0, %s34
      %s38 = sphi 0, %s37
      %s54 = sphi 0, %s38
      %s60 = sphi 0, %s62
      %s63 = sphi 0, %s60
      %s64 = sphi 0, %s63
      %s80 = sphi 0, %s64
      %s86 = sphi 0, %s88
      %s89 = sphi 0, %s86
      %s90 = sphi 0, %s89
      %s106 = sphi 0, %s90
      %s114 = sphi 0, %s116
      %s117 = sphi 0, %s114
      %s118 = sphi 0, %s117
      %s134 = sphi 0, %s118
    $region4: #{time_series_projector.1} parent=1 // loop_header_branch
      %15 = sbr.rel (%p13) target = $region8
    $region5: #{time_series_projector.1} parent=1 // loop_body
      %s17 = ssub.s32 %s12, 1
      %s18 = ssub.s32 %s12, 2
      %s25 = sadd.s32 1, %s20
      %p26 = scmp.ge.s32.totalorder %s25, 2
      %s27 = scalar_select %p26, 0, %s25
      %s28 = sadd.s32 1, %s19
      %s29 = scalar_select %p26, %s28, %s19
      %p30 = scmp.ge.s32.totalorder %s29, 1
      %s31 = scalar_select %p30, 0, %s29
      %s32 = ssub.s32 %s19, %s31
      %p33 = scmp.eq.s32.totalorder %s32, 0
      %s35 = sadd.s32 %s34, 1
      %s36 = scalar_select %p33, %s34, %s35
      %p39 = pneg %p33
      %p40 = scmp.eq.s32.totalorder %s12, 1
      %p41 = por %p39, %p40
      %p42 = scmp.ne.s32.totalorder %s34, %s37
      %p43 = scmp.eq.s32.totalorder %s12, 0
      %p44 = por %p42, %p43
      %p45 = scmp.ne.s32.totalorder %s34, %s37
      %p46 = scmp.eq.s32.totalorder %s17, 1
      %p47 = por %p45, %p46
      %p48 = scmp.ne.s32.totalorder %s37, %s38
      %p49 = scmp.eq.s32.totalorder %s17, 0
      %p50 = por %p48, %p49
      %p51 = scmp.ne.s32.totalorder %s37, %s38
      %p52 = scmp.eq.s32.totalorder %s18, 1
      %p53 = por %p51, %p52
      %p55 = scmp.ne.s32.totalorder %s38, %s54
      %p56 = scmp.eq.s32.totalorder %s18, 0
      %p57 = por %p55, %p56
      %s58 = ssub.s32 %s20, %s27
      %p59 = scmp.eq.s32.totalorder %s58, 0
      %s61 = sadd.s32 %s60, 1
      %s62 = scalar_select %p59, %s60, %s61
      %p65 = pneg %p59
      %p66 = scmp.eq.s32.totalorder %s12, 1
      %p67 = por %p65, %p66
      %p68 = scmp.ne.s32.totalorder %s60, %s63
      %p69 = scmp.eq.s32.totalorder %s12, 0
      %p70 = por %p68, %p69
      %p71 = scmp.ne.s32.totalorder %s60, %s63
      %p72 = scmp.eq.s32.totalorder %s17, 1
      %p73 = por %p71, %p72
      %p74 = scmp.ne.s32.totalorder %s63, %s64
      %p75 = scmp.eq.s32.totalorder %s17, 0
      %p76 = por %p74, %p75
      %p77 = scmp.ne.s32.totalorder %s63, %s64
      %p78 = scmp.eq.s32.totalorder %s18, 1
      %p79 = por %p77, %p78
      %p81 = scmp.ne.s32.totalorder %s64, %s80
      %p82 = scmp.eq.s32.totalorder %s18, 0
      %p83 = por %p81, %p82
      %s84 = ssub.s32 %s20, %s27
      %p85 = scmp.eq.s32.totalorder %s84, 0
      %s87 = sadd.s32 %s86, 1
      %s88 = scalar_select %p85, %s86, %s87
      %p91 = pneg %p85
      %p92 = scmp.eq.s32.totalorder %s12, 1
      %p93 = por %p91, %p92
      %p94 = scmp.ne.s32.totalorder %s86, %s89
      %p95 = scmp.eq.s32.totalorder %s12, 0
      %p96 = por %p94, %p95
      %p97 = scmp.ne.s32.totalorder %s86, %s89
      %p98 = scmp.eq.s32.totalorder %s17, 1
      %p99 = por %p97, %p98
      %p100 = scmp.ne.s32.totalorder %s89, %s90
      %p101 = scmp.eq.s32.totalorder %s17, 0
      %p102 = por %p100, %p101
      %p103 = scmp.ne.s32.totalorder %s89, %s90
      %p104 = scmp.eq.s32.totalorder %s18, 1
      %p105 = por %p103, %p104
      %p107 = scmp.ne.s32.totalorder %s90, %s106
      %p108 = scmp.eq.s32.totalorder %s18, 0
      %p109 = por %p107, %p108
      %s110 = ssub.s32 %s19, %s31
      %s111 = ssub.s32 %s20, %s27
      %s112 = sor.u32 %s110, %s111
      %p113 = scmp.eq.s32.totalorder %s112, 0
      %s115 = sadd.s32 %s114, 1
      %s116 = scalar_select %p113, %s114, %s115
      %p119 = pneg %p113
      %p120 = scmp.eq.s32.totalorder %s12, 1
      %p121 = por %p119, %p120
      %p122 = scmp.ne.s32.totalorder %s114, %s117
      %p123 = scmp.eq.s32.totalorder %s12, 0
      %p124 = por %p122, %p123
      %p125 = scmp.ne.s32.totalorder %s114, %s117
      %p126 = scmp.eq.s32.totalorder %s17, 1
      %p127 = por %p125, %p126
      %p128 = scmp.ne.s32.totalorder %s117, %s118
      %p129 = scmp.eq.s32.totalorder %s17, 0
      %p130 = por %p128, %p129
      %p131 = scmp.ne.s32.totalorder %s117, %s118
      %p132 = scmp.eq.s32.totalorder %s18, 1
      %p133 = por %p131, %p132
      %p135 = scmp.ne.s32.totalorder %s118, %s134
      %p136 = scmp.eq.s32.totalorder %s18, 0
      %p137 = por %p135, %p136
      %p138 = scmp.le.s32.totalorder 1, %s12
      %p139 = scmp.lt.s32.totalorder %s12, 3
      %p140 = pnand %p138, %p139
      %p141 = pneg %p140
      // Predicated region
      $region9: #{time_series_projector.1} parent=5 // pred_check
        _
      $region10: #{time_series_projector.1} parent=5 // pred_check_branch
        %143 = sbr.rel (%p140) target = $region12
      $region11: #{time_series_projector.1} parent=5 // pred_region
        %s144 = ssub.s32 %s12, 1
        // Predicated region
        $region13: #{time_series_projector.1} parent=11 // pred_check
          %p145 = pneg %p50
        $region14: #{time_series_projector.1} parent=11 // pred_check_branch
          %147 = sbr.rel (%p145) target = $region16
        $region15: #{time_series_projector.1} parent=11 // pred_region
          %s148 = smul.u32 2, %s21
          %p149 = scmp.lt.s32.totalorder %s148, 1
          %s150 = scalar_select %p149, %s148, 1
          %s151 = smul.addr %s150, 8
          %s152 = scalar_lea.vmem %s0, %s151
          %s153 = smul.u32 2, %s21
        $region16: #{time_series_projector.1} parent=11 // pred_fallthru
          _
      $region12: #{time_series_projector.1} parent=5 // pred_fallthru
        _
      %p154 = scmp.lt.s32.totalorder %s12, 2
      // Predicated region
      $region17: #{time_series_projector.1} parent=5 // pred_check
        %p155 = pneg %p154
      $region18: #{time_series_projector.1} parent=5 // pred_check_branch
        %157 = sbr.rel (%p155) target = $region20
      $region19: #{time_series_projector.1} parent=5 // pred_region
        // Predicated region
        $region21: #{time_series_projector.1} parent=19 // pred_check
          %p158 = pneg %p70
        $region22: #{time_series_projector.1} parent=19 // pred_check_branch
          %160 = sbr.rel (%p158) target = $region24
        $region23: #{time_series_projector.1} parent=19 // pred_region
          %s161 = smul.u32 3, %s20
          %p162 = scmp.lt.s32.totalorder %s161, 5
          %s163 = scalar_select %p162, %s161, 5
          %s164 = smul.addr %s163, 4
          %s165 = scalar_lea.vmem %s1, %s164
          %s166 = smul.u32 3, %s20
        $region24: #{time_series_projector.1} parent=19 // pred_fallthru
          _
        // Predicated region
        $region25: #{time_series_projector.1} parent=19 // pred_check
          %p167 = pneg %p96
        $region26: #{time_series_projector.1} parent=19 // pred_check_branch
          %169 = sbr.rel (%p167) target = $region28
        $region27: #{time_series_projector.1} parent=19 // pred_region
          %s170 = smul.u32 3, %s20
          %p171 = scmp.lt.s32.totalorder %s170, 5
          %s172 = scalar_select %p171, %s170, 5
          %s173 = scalar_lea.vmem %s2, %s172
          %s174 = smul.u32 3, %s20
        $region28: #{time_series_projector.1} parent=19 // pred_fallthru
          _
      $region20: #{time_series_projector.1} parent=5 // pred_fallthru
        _
      %p175 = scmp.le.s32.totalorder 1, %s12
      %p176 = scmp.lt.s32.totalorder %s12, 3
      %p177 = pnand %p175, %p176
      %p178 = pneg %p177
      // Predicated region
      $region29: #{time_series_projector.1} parent=5 // pred_check
        _
      $region30: #{time_series_projector.1} parent=5 // pred_check_branch
        %180 = sbr.rel (%p177) target = $region32
      $region31: #{time_series_projector.1} parent=5 // pred_region
        %s181 = ssub.s32 %s12, 1
        %s182 = smul.u32 2, %s21
        %p183 = scmp.lt.s32.totalorder %s182, 1
        %s184 = scalar_select %p183, %s182, 1
        %s185 = smul.addr %s184, 8
        %s186 = scalar_lea.vmem %s0, %s185
        %p187 = pneg %p50
        %p188 = pneg %p47
        %s189 = smul.u32 3, %s22
        %p190 = scmp.lt.s32.totalorder %s189, 5
        %s191 = scalar_select %p190, %s189, 5
        %s192 = smul.addr %s191, 4
        %s193 = scalar_lea.vmem %s1, %s192
        %p194 = pneg %p76
        %p195 = pneg %p73
        %s196 = smul.u32 3, %s22
        %p197 = scmp.lt.s32.totalorder %s196, 5
        %s198 = scalar_select %p197, %s196, 5
        %s199 = scalar_lea.vmem %s2, %s198
        %p200 = pneg %p102
        %p201 = pneg %p99
        %p202 = pneg %p130
        %p203 = pneg %p127
        %s204 = sand.u32 %s117, 1
        %s205 = scalar_lea.sflag [#allocation3], %s204
        %s206 = sand.u32 %s117, 1
        %s207 = smul.addr %s206, 48
        %s208 = scalar_lea.vmem [#allocation2], %s207
        %s209 = smul.u32 2, %s21
        %p210 = scmp.lt.s32.totalorder %s209, 1
        %s211 = scalar_select %p210, %s209, 1
        %s212 = smul.addr %s211, 8
        %s213 = scalar_lea.vmem %s0, %s212
        %s214 = smul.u32 2, %s21
        %s215 = smul.u32 3, %s22
        %p216 = scmp.lt.s32.totalorder %s215, 5
        %s217 = scalar_select %p216, %s215, 5
        %s218 = smul.addr %s217, 4
        %s219 = scalar_lea.vmem %s1, %s218
        %s220 = smul.u32 3, %s22
        %s221 = smul.u32 3, %s22
        %p222 = scmp.lt.s32.totalorder %s221, 5
        %s223 = scalar_select %p222, %s221, 5
        %s224 = scalar_lea.vmem %s2, %s223
        %s225 = smul.u32 3, %s22
        %s226 = smul.u32 2, %s21
        %s227 = smul.u32 3, %s22
        %v228 = vld [vmem:[%s213] sm:$0xff]
        %v229 = vld [vmem:[%s213 + $0x8] sm:$0xff]
        %v230 = vld [vmem:[%s219] sm:$0xff]
        %v231 = vld [vmem:[%s219 + $0x8] sm:$0xf]
        %v232 = vld [vmem:[%s224] sm:$0x7]
        %234 = vset.pattern.permute.xlu0 0
        %235 = vperm.xlu0 %234, %v228
        %v236 = vpop.permute.xlu0 %235
        %239 = vset.pattern.permute.xlu0 0
        %240 = vperm.xlu0 %239, %v229
        %v241 = vpop.permute.xlu0 %240
        %v245 = vlaneseq
        %v246 = vshrl.u32 %v245, 7
        %v247 = vsub.s32 0, %v246
        %v248 = vrot.slane %v230, %v247
        %v249 = vlaneseq
        %v250 = vshrl.u32 %v249, 7
        %v251 = vsub.s32 4, %v250
        %v252 = vrot.slane %v230, %v251
        %v253 = vlaneseq
        %v254 = vshrl.u32 %v253, 7
        %v255 = vsub.s32 0, %v254
        %v256 = vrot.slane %v231, %v255
        %v260 = vlaneseq
        %v261 = vshrl.u32 %v260, 7
        %v262 = vsub.s32 0, %v261
        %v263 = vrot.slane %v248, %v262
        %v264 = vlaneseq
        %v265 = vshrl.u32 %v264, 7
        %v266 = vsub.s32 0, %v265
        %v267 = vrot.slane %v252, %v266
        %v268 = vlaneseq
        %v269 = vshrl.u32 %v268, 7
        %v270 = vsub.s32 0, %v269
        %v271 = vrot.slane %v256, %v270
        %v272 = vmul.f32 %v236, %v263
        %v273 = vmul.f32 %v236, %v267
        %v274 = vmul.f32 %v236, %v271
        %v275 = vmul.f32 %v241, %v263
        %v276 = vmul.f32 %v241, %v267
        %v277 = vmul.f32 %v241, %v271
        %278 = vset.pattern.permute.xlu0 1
        %279 = vperm.xlu0 %278, %v228
        %v280 = vpop.permute.xlu0 %279
        %282 = vset.pattern.permute.xlu0 1
        %283 = vperm.xlu0 %282, %v229
        %v284 = vpop.permute.xlu0 %283
        %v286 = vlaneseq
        %v287 = vshrl.u32 %v286, 7
        %v288 = vsub.s32 1, %v287
        %v289 = vrot.slane %v230, %v288
        %v290 = vlaneseq
        %v291 = vshrl.u32 %v290, 7
        %v292 = vsub.s32 5, %v291
        %v293 = vrot.slane %v230, %v292
        %v294 = vlaneseq
        %v295 = vshrl.u32 %v294, 7
        %v296 = vsub.s32 1, %v295
        %v297 = vrot.slane %v231, %v296
        %v301 = vlaneseq
        %v302 = vshrl.u32 %v301, 7
        %v303 = vsub.s32 1, %v302
        %v304 = vrot.slane %v289, %v303
        %v305 = vlaneseq
        %v306 = vshrl.u32 %v305, 7
        %v307 = vsub.s32 1, %v306
        %v308 = vrot.slane %v293, %v307
        %v309 = vlaneseq
        %v310 = vshrl.u32 %v309, 7
        %v311 = vsub.s32 1, %v310
        %v312 = vrot.slane %v297, %v311
        %v313 = vmul.f32 %v280, %v304
        %v314 = vmul.f32 %v280, %v308
        %v315 = vmul.f32 %v280, %v312
        %v316 = vmul.f32 %v284, %v304
        %v317 = vmul.f32 %v284, %v308
        %v318 = vmul.f32 %v284, %v312
        %v319 = vadd.f32 %v272, %v313
        %v320 = vadd.f32 %v273, %v314
        %v321 = vadd.f32 %v274, %v315
        %v322 = vadd.f32 %v275, %v316
        %v323 = vadd.f32 %v276, %v317
        %v324 = vadd.f32 %v277, %v318
        %325 = vset.pattern.permute.xlu0 2
        %326 = vperm.xlu0 %325, %v228
        %v327 = vpop.permute.xlu0 %326
        %329 = vset.pattern.permute.xlu0 2
        %330 = vperm.xlu0 %329, %v229
        %v331 = vpop.permute.xlu0 %330
        %v333 = vlaneseq
        %v334 = vshrl.u32 %v333, 7
        %v335 = vsub.s32 2, %v334
        %v336 = vrot.slane %v230, %v335
        %v337 = vlaneseq
        %v338 = vshrl.u32 %v337, 7
        %v339 = vsub.s32 6, %v338
        %v340 = vrot.slane %v230, %v339
        %v341 = vlaneseq
        %v342 = vshrl.u32 %v341, 7
        %v343 = vsub.s32 2, %v342
        %v344 = vrot.slane %v231, %v343
        %v348 = vlaneseq
        %v349 = vshrl.u32 %v348, 7
        %v350 = vsub.s32 2, %v349
        %v351 = vrot.slane %v336, %v350
        %v352 = vlaneseq
        %v353 = vshrl.u32 %v352, 7
        %v354 = vsub.s32 2, %v353
        %v355 = vrot.slane %v340, %v354
        %v356 = vlaneseq
        %v357 = vshrl.u32 %v356, 7
        %v358 = vsub.s32 2, %v357
        %v359 = vrot.slane %v344, %v358
        %v360 = vmul.f32 %v327, %v351
        %v361 = vmul.f32 %v327, %v355
        %v362 = vmul.f32 %v327, %v359
        %v363 = vmul.f32 %v331, %v351
        %v364 = vmul.f32 %v331, %v355
        %v365 = vmul.f32 %v331, %v359
        %v366 = vadd.f32 %v319, %v360
        %v367 = vadd.f32 %v320, %v361
        %v368 = vadd.f32 %v321, %v362
        %v369 = vadd.f32 %v322, %v363
        %v370 = vadd.f32 %v323, %v364
        %v371 = vadd.f32 %v324, %v365
        %372 = vset.pattern.permute.xlu0 3
        %373 = vperm.xlu0 %372, %v228
        %v374 = vpop.permute.xlu0 %373
        %376 = vset.pattern.permute.xlu0 3
        %377 = vperm.xlu0 %376, %v229
        %v378 = vpop.permute.xlu0 %377
        %v380 = vlaneseq
        %v381 = vshrl.u32 %v380, 7
        %v382 = vsub.s32 3, %v381
        %v383 = vrot.slane %v230, %v382
        %v384 = vlaneseq
        %v385 = vshrl.u32 %v384, 7
        %v386 = vsub.s32 7, %v385
        %v387 = vrot.slane %v230, %v386
        %v388 = vlaneseq
        %v389 = vshrl.u32 %v388, 7
        %v390 = vsub.s32 3, %v389
        %v391 = vrot.slane %v231, %v390
        %v395 = vlaneseq
        %v396 = vshrl.u32 %v395, 7
        %v397 = vsub.s32 3, %v396
        %v398 = vrot.slane %v383, %v397
        %v399 = vlaneseq
        %v400 = vshrl.u32 %v399, 7
        %v401 = vsub.s32 3, %v400
        %v402 = vrot.slane %v387, %v401
        %v403 = vlaneseq
        %v404 = vshrl.u32 %v403, 7
        %v405 = vsub.s32 3, %v404
        %v406 = vrot.slane %v391, %v405
        %v407 = vmul.f32 %v374, %v398
        %v408 = vmul.f32 %v374, %v402
        %v409 = vmul.f32 %v374, %v406
        %v410 = vmul.f32 %v378, %v398
        %v411 = vmul.f32 %v378, %v402
        %v412 = vmul.f32 %v378, %v406
        %v413 = vadd.f32 %v366, %v407
        %v414 = vadd.f32 %v367, %v408
        %v415 = vadd.f32 %v368, %v409
        %v416 = vadd.f32 %v369, %v410
        %v417 = vadd.f32 %v370, %v411
        %v418 = vadd.f32 %v371, %v412
        %v420 = vlaneseq
        %v421 = vshrl.u32 %v420, 7
        %v422 = vsub.s32 0, %v421
        %v423 = vrot.slane %v232, %v422
        %v424 = vlaneseq
        %v425 = vshrl.u32 %v424, 7
        %v426 = vsub.s32 1, %v425
        %v427 = vrot.slane %v232, %v426
        %v428 = vlaneseq
        %v429 = vshrl.u32 %v428, 7
        %v430 = vsub.s32 2, %v429
        %v431 = vrot.slane %v232, %v430
        %v435 = vadd.f32 %v413, %v423
        %v436 = vadd.f32 %v414, %v427
        %v437 = vadd.f32 %v415, %v431
        %v438 = vadd.f32 %v416, %v423
        %v439 = vadd.f32 %v417, %v427
        %v440 = vadd.f32 %v418, %v431
        %441 = vst [vmem:[%s208] sm:$0xff] %v435
        %442 = vst [vmem:[%s208 + $0x8] sm:$0xff] %v436
        %443 = vst [vmem:[%s208 + $0x10] sm:$0xff] %v437
        %444 = vst [vmem:[%s208 + $0x18] sm:$0xff] %v438
        %445 = vst [vmem:[%s208 + $0x20] sm:$0xff] %v439
        %446 = vst [vmem:[%s208 + $0x28] sm:$0xff] %v440
        %s447 = sand.u32 %s117, 1
        %s448 = scalar_lea.sflag [#allocation3], %s447
        %s449 = sand.u32 %s117, 1
        %s450 = smul.addr %s449, 48
        %s451 = scalar_lea.vmem [#allocation2], %s450
        // Predicated region
        $region33: #{time_series_projector.1} parent=31 // pred_check
          %p452 = pneg %p127
        $region34: #{time_series_projector.1} parent=31 // pred_check_branch
          %454 = sbr.rel (%p452) target = $region36
        $region35: #{time_series_projector.1} parent=31 // pred_region
          %s455 = smul.u32 2, %s21
          %s456 = smul.u32 3, %s22
          %s458 = ssub.s32 768, 768
          %459 = vsyncadd %s448, %s458
          %s460 = smul.addr %s455, 6
          %s461 = sadd.s32 %s456, %s460
          %s462 = smul.addr %s461, 128
          %s463 = scalar_lea.hbm %s3, %s462
          %s464 = sshll.u32 %s451, 4
          %s465 = int_to_ptr.vmem [resolvable:$true] %s464
          %470 = dma.vmem_to_hbm [thread:$0]  %s465, 768, %s463, %s448, 384, 768, 24
        $region36: #{time_series_projector.1} parent=31 // pred_fallthru
          _
      $region32: #{time_series_projector.1} parent=5 // pred_fallthru
        _
      %p471 = scmp.le.s32.totalorder 2, %s12
      // Predicated region
      $region37: #{time_series_projector.1} parent=5 // pred_check
        %p472 = pneg %p471
      $region38: #{time_series_projector.1} parent=5 // pred_check_branch
        %474 = sbr.rel (%p472) target = $region40
      $region39: #{time_series_projector.1} parent=5 // pred_region
        %s475 = ssub.s32 %s12, 2
        // Predicated region
        $region41: #{time_series_projector.1} parent=39 // pred_check
          %p476 = pneg %p133
        $region42: #{time_series_projector.1} parent=39 // pred_check_branch
          %478 = sbr.rel (%p476) target = $region44
        $region43: #{time_series_projector.1} parent=39 // pred_region
          %s479 = sand.u32 %s118, 1
          %s480 = scalar_lea.sflag [#allocation3], %s479
          %s481 = sand.u32 %s118, 1
          %s482 = smul.addr %s481, 48
          %s483 = scalar_lea.vmem [#allocation2], %s482
          %484 = dma.done %s480, 768
        $region44: #{time_series_projector.1} parent=39 // pred_fallthru
          _
      $region40: #{time_series_projector.1} parent=5 // pred_fallthru
        _
    $region6: #{time_series_projector.1} parent=1 // loop_footer
      %s16 = sadd.s32 1, %s12
    $region7: #{time_series_projector.1} parent=1 // loop_footer_branch
      %11 = sbr.rel target = $region3
    $region8: #{time_series_projector.1} parent=1 // loop_exit
      _
    %485 = vsyncpa [#allocation3], 1
    %s486 = scalar_lea.sflag [#allocation3], 1
    %487 = vsyncpa %s486, 1

</llo_original>
